<compile_context>
chip_gen: v6e
topology: v6e:2x2x1
jax: 0.10.0
libtpu: 0.0.40
codegen_flags: <defaults>
</compile_context>

<pallas_src>
import functools

import jax
import jax.numpy as jnp
from jax import lax
from jax.experimental import pallas as pl
from jax.experimental.pallas import tpu as pltpu

EPS = 1e-5
WIN = 64          # per-sample lane window (= conv1 output length for L=1024)


# ---------------- pltpu.roll direction probe (one-time, tiny) -----------------

@functools.cache
def _roll_probe(_backend_key: str) -> bool:
    """True iff pltpu.roll(x, s, axis=-1)[i] == x[i - s] (np.roll convention)."""
    def k(x_ref, o_ref):
        o_ref[...] = pltpu.roll(x_ref[...], 1, axis=1)
    x = jnp.tile(jnp.arange(128, dtype=jnp.float32)[None, :], (8, 1))
    y = jax.jit(pl.pallas_call(
        k, out_shape=jax.ShapeDtypeStruct((8, 128), jnp.float32)))(x)
    return bool(y[0, 1] == 0.0)


def _roll_matches_numpy() -> bool:
    d = jax.devices()[0]
    return _roll_probe(f"{d.platform}:{d.device_kind}")


@functools.cache
def _ew_bf16_default() -> bool:
    # v5e has no bf16 VALU; keep elementwise roll/mask/pool math in f32 there.
    try:
        kind = jax.devices()[0].device_kind.lower()
    except Exception:
        return True
    return not ("v5 lite" in kind or "v5e" in kind)


def _round_up(v: int, m: int) -> int:
    return ((v + m - 1) // m) * m


# --------------------------------- the kernel ---------------------------------

def _make_kernel(nlanes: int, roll_np: bool, ew_dtype):
    N = nlanes
    ROW = {1: 0, 2: 1, 4: 2, 8: 3, 16: 4}   # mask row per shift amount

    def shift_prev(h, s):            # value of h[:, t - s] at lane t (wrapped)
        return pltpu.roll(h, s if roll_np else N - s, axis=1)

    def shift_next(h, s):            # value of h[:, t + s] at lane t (wrapped)
        return pltpu.roll(h, N - s if roll_np else s, axis=1)

    def kernel(xc_ref, m_ref, w1_ref, w2_ref, w3_ref, w4_ref, w5_ref,
               ts_ref, sel_ref, wf1_ref, bf1_ref, wf2_ref, bf2_ref, out_ref):
        # TODO(synk): BatchNorm1d is folded in inference mode (running stats);
        # training-mode batch statistics are not computed inside the kernel.
        ts = ts_ref[...]                           # (240, 1) packed BN shifts
        m = m_ref[...]                             # (10, N) 0/1 boundary masks

        def mprev(s):
            r = ROW[s]
            return m[r:r + 1]

        def mnext(s):
            r = ROW[s] + 5
            return m[r:r + 1]

        def maxpool(h, s):
            # MaxPool1d(2, 2): valid lanes go from stride s to stride 2*s; the
            # wrapped lane never lands on a valid output position, so no mask.
            return jnp.maximum(h, shift_next(h, s))

        def conv3(h, w_ref, shift, s):
            # Conv1d(k=3, stride=1, pad=1) on stride-`s` dilated lanes + folded
            # BN, fused into ONE matmul: [prev; center; next] stacked along the
            # sublane (channel) axis against a (Cout, 3*Cin) weight.
            h_prev = shift_prev(h, s) * mprev(s)
            h_next = shift_next(h, s) * mnext(s)
            h3 = jnp.concatenate([h_prev, h, h_next], axis=0).astype(jnp.bfloat16)
            y = jnp.dot(w_ref[...], h3, preferred_element_type=jnp.float32)
            return (y + shift).astype(ew_dtype)

        # Stage 1: Conv1d(1->16, k=64, s=16, p=24) built in-kernel.  The input
        # arrives chunked: xc[r, b*64 + c] = x[b, 16*c + r].  Output position t
        # covers chunks t-2 .. t+2 of the same sample, so 4 lane rolls + one
        # (16, 80) matmul reproduce the strided conv (masks re-zero the lanes
        # that correspond to PyTorch's zero padding / sample boundaries).
        xc = xc_ref[0].astype(ew_dtype)                                  # (16, N)
        x80 = jnp.concatenate(
            [shift_prev(xc, 2) * mprev(2),         # chunk t-2 (rows 8..15 used)
             shift_prev(xc, 1) * mprev(1),         # chunk t-1
             xc,                                   # chunk t
             shift_next(xc, 1) * mnext(1),         # chunk t+1
             shift_next(xc, 2) * mnext(2)],        # chunk t+2 (rows 0..7 used)
            axis=0).astype(jnp.bfloat16)                                 # (80, N)
        h = jnp.dot(w1_ref[...], x80, preferred_element_type=jnp.float32)
        h = (h + ts[0:16]).astype(ew_dtype)                              # (16, N)
        h = maxpool(h, 1)                                                # stride 2

        # Stages 2-5: fused Conv(k=3,p=1)+BN + MaxPool(2,2) on dilated lanes.
        h = maxpool(conv3(h, w2_ref, ts[16:48],   2), 2)                 # (32, N) s=4
        h = maxpool(conv3(h, w3_ref, ts[48:112],  4), 4)                 # (64, N) s=8
        h = maxpool(conv3(h, w4_ref, ts[112:176], 8), 8)                 # (64, N) s=16
        h = maxpool(conv3(h, w5_ref, ts[176:240], 16), 16)               # (64, N) s=32

        # FC head: the two surviving time positions (local lanes 0 and 32) are
        # stacked along channels -> (128, N), then compacted with ONE 0/1
        # select matmul to (128, BB).  fc1 columns are pre-reordered to match.
        h2 = jnp.concatenate([h, shift_next(h, 32)],
                             axis=0).astype(jnp.bfloat16)                # (128, N)
        hc = jnp.dot(h2, sel_ref[...], preferred_element_type=jnp.float32)  # (128, BB)
        z = (jnp.dot(wf1_ref[...], hc.astype(jnp.bfloat16),
                     preferred_element_type=jnp.float32) + bf1_ref[...])    # (100, BB)
        z = jnp.maximum(z, 0.0).astype(jnp.bfloat16)
        logits = jnp.dot(wf2_ref[...], z,
                         preferred_element_type=jnp.float32) + bf2_ref[...]  # (10, BB)
        out_ref[...] = logits[None]

    return kernel


# ------------------------------ wrapper / glue --------------------------------

def init_params(key):
    conv_defs = [(1, 16, 64), (16, 32, 3), (32, 64, 3), (64, 64, 3), (64, 64, 3)]
    p = {}
    for i, (cin, cout, k) in enumerate(conv_defs, start=1):
        key, k1, k2, k3, k4, k5, k6 = jax.random.split(key, 7)
        fan_in = float(cin * k)
        p[f'c{i}_w'] = jax.random.normal(k1, (cout, cin, k), jnp.float32) / jnp.sqrt(fan_in)
        p[f'c{i}_b'] = 0.1 * jax.random.normal(k2, (cout,), jnp.float32)
        p[f'bn{i}_g'] = 1.0 + 0.1 * jax.random.normal(k3, (cout,), jnp.float32)
        p[f'bn{i}_b'] = 0.1 * jax.random.normal(k4, (cout,), jnp.float32)
        p[f'bn{i}_m'] = 0.1 * jax.random.normal(k5, (cout,), jnp.float32)
        p[f'bn{i}_v'] = 0.5 + jax.random.uniform(k6, (cout,), jnp.float32)
    key, k1, k2, k3, k4 = jax.random.split(key, 5)
    p['fc1_w'] = jax.random.normal(k1, (100, 128), jnp.float32) / jnp.sqrt(128.0)
    p['fc1_b'] = 0.1 * jax.random.normal(k2, (100,), jnp.float32)
    p['fc2_w'] = jax.random.normal(k3, (10, 100), jnp.float32) / jnp.sqrt(100.0)
    p['fc2_b'] = 0.1 * jax.random.normal(k4, (10,), jnp.float32)
    return p


@functools.partial(jax.jit, static_argnames=("block_batch", "roll_np", "ew_bf16"))
def _forward_impl(x, p, *, block_batch, roll_np, ew_bf16):
    ew = jnp.bfloat16 if ew_bf16 else jnp.float32
    B = x.shape[0]
    assert x.shape[1:] == (1, 1024), "WDCNN's Linear(128, ...) requires input length 1024"
    # Block batch: multiple of 8 (keeps N a multiple of 512).  On v7x pick the
    # call-site block_batch so that ceil(B/BB) is even (both TensorCores busy).
    BB = max(8, min(_round_up(block_batch, 8), _round_up(B, 8)))
    Bp = _round_up(B, BB)
    G = Bp // BB
    N = BB * WIN

    if Bp != B:
        x = jnp.pad(x, ((0, Bp - B), (0, 0), (0, 0)))

    # Chunked signal layout for the in-kernel conv1:
    # xc[g, r, b*64 + c] = x[g*BB + b, 0, 16*c + r]   (bf16, same bytes as input/2)
    xc = (x[:, 0, :].reshape(G, BB, WIN, 16).transpose(0, 3, 1, 2)
          .reshape(G, 16, N).astype(jnp.bfloat16))

    # Fold conv bias + inference-mode BN: scale goes into the conv weights,
    # per-channel shifts are packed into one (240, 1) operand.
    def fold(i):
        scale = p[f'bn{i}_g'] / jnp.sqrt(p[f'bn{i}_v'] + EPS)
        shift = p[f'bn{i}_b'] + scale * (p[f'c{i}_b'] - p[f'bn{i}_m'])
        return scale, shift

    scales, shifts = zip(*(fold(i) for i in range(1, 6)))
    ts = jnp.concatenate(shifts)[:, None].astype(jnp.float32)          # (240, 1)

    # Conv1 weight re-sliced per chunk offset (t-2 .. t+2) -> (16, 80).
    w1s = p['c1_w'][:, 0, :] * scales[0][:, None]                      # (16, 64)
    z8 = jnp.zeros((16, 8), w1s.dtype)
    w1 = jnp.concatenate([
        jnp.concatenate([z8, w1s[:, 0:8]], axis=1),    # chunk t-2: taps j=0..7  -> rows 8..15
        w1s[:, 8:24],                                   # chunk t-1: taps j=8..23
        w1s[:, 24:40],                                  # chunk t  : taps j=24..39
        w1s[:, 40:56],                                  # chunk t+1: taps j=40..55
        jnp.concatenate([w1s[:, 56:64], z8], axis=1),   # chunk t+2: taps j=56..63 -> rows 0..7
    ], axis=1).astype(jnp.bfloat16)                                    # (16, 80)

    def wk(i):                                                         # (Cout, 3*Cin)
        w = p[f'c{i}_w'] * scales[i - 1][:, None, None]                # (Cout, Cin, 3)
        cout, cin, _ = w.shape
        return w.transpose(0, 2, 1).reshape(cout, 3 * cin).astype(jnp.bfloat16)

    w2, w3, w4, w5 = wk(2), wk(3), wk(4), wk(5)

    # Precomputed 0/1 boundary masks (rows 0-4: prev shift s=1,2,4,8,16;
    # rows 5-9: next shift s=1,2,4,8,16).
    lid = jnp.arange(N, dtype=jnp.int32) % WIN
    masks = jnp.concatenate(
        [jnp.stack([(lid >= s) for s in (1, 2, 4, 8, 16)]),
         jnp.stack([(lid < WIN - s) for s in (1, 2, 4, 8, 16)])],
        axis=0).astype(ew)                                             # (10, N)

    # Single 0/1 select matrix pulling local lane 0 of each sample.
    lane = jnp.arange(N)[:, None]
    samp = jnp.arange(BB)[None, :] * WIN
    sel = (lane == samp).astype(jnp.bfloat16)                          # (N, BB)

    # FC weights: torch Flatten over (C=64, L=2) is channel-major (col = c*2+l);
    # reorder columns to [position-0 channels | position-1 channels].
    wf1 = jnp.concatenate([p['fc1_w'][:, 0::2], p['fc1_w'][:, 1::2]],
                          axis=1).astype(jnp.bfloat16)                 # (100, 128)
    bf1 = p['fc1_b'][:, None].astype(jnp.float32)                      # (100, 1)
    wf2 = p['fc2_w'].astype(jnp.bfloat16)                              # (10, 100)
    bf2 = p['fc2_b'][:, None].astype(jnp.float32)                      # (10, 1)

    operands = [xc, masks, w1, w2, w3, w4, w5, ts, sel, wf1, bf1, wf2, bf2]

    def const_spec(a):  # full-array block, constant index map (never re-DMA'd)
        return pl.BlockSpec(a.shape, lambda g, _nd=a.ndim: (0,) * _nd)

    in_specs = ([pl.BlockSpec((1, 16, N), lambda g: (g, 0, 0))]
                + [const_spec(a) for a in operands[1:]])

    out = pl.pallas_call(
        _make_kernel(N, roll_np, ew),
        out_shape=jax.ShapeDtypeStruct((G, 10, BB), jnp.float32),
        grid=(G,),
        in_specs=in_specs,
        out_specs=pl.BlockSpec((1, 10, BB), lambda g: (g, 0, 0)),
        compiler_params=pltpu.CompilerParams(
            dimension_semantics=("parallel",),
            vmem_limit_bytes=32 * 1024 * 1024),   # v5e default scoped VMEM is 16 MiB
    )(*operands)                                                       # (G, 10, BB)

    return out.transpose(0, 2, 1).reshape(Bp, 10)[:B]                  # (B, 10)


def wdcnn_forward(x, params, block_batch=32):
    return _forward_impl(x, params, block_batch=block_batch,
                         roll_np=_roll_matches_numpy(),
                         ew_bf16=_ew_bf16_default())


# ----------------------------- pure-JAX reference -----------------------------

def ref_forward(x, p):
    hp = lax.Precision.HIGHEST

    def conv1d(h, w, b, stride, pad):
        y = lax.conv_general_dilated(h, w, (stride,), [(pad, pad)],
                                     dimension_numbers=('NCH', 'OIH', 'NCH'),
                                     precision=hp)
        return y + b[None, :, None]

    def bn(h, i):
        g, bb, m, v = p[f'bn{i}_g'], p[f'bn{i}_b'], p[f'bn{i}_m'], p[f'bn{i}_v']
        return ((h - m[None, :, None]) / jnp.sqrt(v[None, :, None] + EPS)
                * g[None, :, None] + bb[None, :, None])

    def mp(h):
        B, C, L = h.shape
        return h.reshape(B, C, L // 2, 2).max(-1)

    strides = [16, 1, 1, 1, 1]
    pads = [24, 1, 1, 1, 1]
    h = x
    for i in range(1, 6):
        h = mp(bn(conv1d(h, p[f'c{i}_w'], p[f'c{i}_b'], strides[i - 1], pads[i - 1]), i))
    h = h.reshape(h.shape[0], -1)                                      # (B, 128)
    h = jnp.maximum(jnp.dot(h, p['fc1_w'].T, precision=hp) + p['fc1_b'], 0.0)
    return jnp.dot(h, p['fc2_w'].T, precision=hp) + p['fc2_b']


# ------------------------------------ main ------------------------------------

if __name__ == "__main__":
    key = jax.random.PRNGKey(0)
    kx, kp = jax.random.split(key)
    B = 64
    # Length 1024 is the only spatial size consistent with Linear(128, 100).
    x = jax.random.normal(kx, (B, 1, 1024), jnp.float32)
    params = init_params(kp)

    out = jax.block_until_ready(wdcnn_forward(x, params))   # BB=32 -> grid of 2
    ref = jax.block_until_ready(ref_forward(x, params))

    assert out.shape == (B, 10)
    # bf16 matmul inputs (f32 accumulation) vs. an all-f32 reference.
    assert bool(jnp.allclose(out, ref, rtol=5e-2, atol=5e-2)), \
        float(jnp.max(jnp.abs(out - ref)))
    print("KERNEL_OK")
</pallas_src>

<mosaic_0001>
module attributes {stable_mosaic.version = 11 : i64} {
  func.func @k(%arg0: memref<8x128xf32, #tpu.memory_space<vmem>>, %arg1: memref<8x128xf32, #tpu.memory_space<vmem>>) attributes {dimension_semantics = [], scalar_prefetch = 0 : i64, scratch_operands = 0 : i64, tpu.core_type = #tpu.core_type<tc>} {
    %c0 = arith.constant 0 : index
    %c0_0 = arith.constant 0 : index
    %0 = vector.load %arg0[%c0, %c0_0] : memref<8x128xf32, #tpu.memory_space<vmem>>, vector<8x128xf32>
    %c1_i32 = arith.constant 1 : i32
    %1 = tpu.dynamic_rotate %0 by %c1_i32 dim 1 : vector<8x128xf32>, i32 -> vector<8x128xf32>
    %c0_1 = arith.constant 0 : index
    %c0_2 = arith.constant 0 : index
    %2 = vector.load %arg1[%c0_1, %c0_2] : memref<8x128xf32, #tpu.memory_space<vmem>>, vector<8x128xf32>
    tpu.vector_store %arg1[%c0_1, %c0_2], %1 {strides = array<i32>} : memref<8x128xf32, #tpu.memory_space<vmem>>, vector<8x128xf32>,
    return
  }
}

</mosaic_0001>

<llo_original>
// kernel: tpu_custom_call.1
$region0: #{tpu_custom_call.1}
  #allocation0 [shape = 'u32[]', space=smem, size = 0x4, offset = 0x4, fixed_abs, tag = 'smem constant byte address 0x4 - core index']
  #allocation1 [shape = 'u32[144,128]{1,0:T(1,128)}', space=vmem, size = 0x12000, scoped, tag = 'internal scratch']
  %s0 = inlined_call_operand.hbm [shape: f32[8,128], index: 0, kind: input, shape index: {}]
  %s1 = inlined_call_operand.hbm [shape: f32[8,128], index: 1, kind: output, shape index: {}]
  %s2 = sld [smem:[#allocation0]]
  $region18: #{tpu_custom_call.1} parent=0
    _
  %s4 = ssub.s32 1, %s2
  %s5 = scalar_select 0, %s4, %s2
  $region1: #{tpu_custom_call.1} parent=0
    #allocation2 [shape = 'u8[4096]{0}', space=vmem, size = 0x1000, scoped, tag = 'input window, operand 0, single buffered']
    #allocation3 [shape = 's32[1]{0}', space=sflag, size = 0x4, scoped, tag = 'scoped memory for tpu_custom_call.1']
    #allocation4 [shape = 's32[1]{0}', space=sflag, size = 0x4, scoped, tag = 'scoped memory for tpu_custom_call.1']
    #allocation5 [shape = 'u8[4096]{0}', space=vmem, size = 0x1000, scoped, tag = 'output window, operand 0, single buffered']
    %6 = vsyncpa [#allocation3], 0
    %7 = vsyncpa [#allocation4], 0
    // Predicated region
    $region2: #{tpu_custom_call.1} parent=1 // pred_check
      _
    $region3: #{tpu_custom_call.1} parent=1 // pred_check_branch
      %9 = sbr.rel (0) target = $region5
    $region4: #{tpu_custom_call.1} parent=1 // pred_region
      %s11 = ssub.s32 128, 128
      %12 = vsyncadd [#allocation3], %s11
      %s14 = sshll.u32 [#allocation2], 4
      %s15 = int_to_ptr.vmem [resolvable:$true] %s14
      %17 = dma.hbm_to_vmem [thread:$0]  %s0, 128, %s15, [#allocation3]
    $region5: #{tpu_custom_call.1} parent=1 // pred_fallthru
      _
    // Predicated region
    $region6: #{tpu_custom_call.1} parent=1 // pred_check
      _
    $region7: #{tpu_custom_call.1} parent=1 // pred_check_branch
      %19 = sbr.rel (0) target = $region9
    $region8: #{tpu_custom_call.1} parent=1 // pred_region
      %20 = dma.done [#allocation3], 128
    $region9: #{tpu_custom_call.1} parent=1 // pred_fallthru
      _
    %v21 = vld [vmem:[#allocation2] sm:$0xff]
    %22 = vrot.lane.b32.xlu0 %v21, 1
    %v23 = vpop.permute.xlu0 %22
    %24 = vst [vmem:[#allocation5] sm:$0xff] %v23
    // Predicated region
    $region10: #{tpu_custom_call.1} parent=1 // pred_check
      _
    $region11: #{tpu_custom_call.1} parent=1 // pred_check_branch
      %26 = sbr.rel (0) target = $region13
    $region12: #{tpu_custom_call.1} parent=1 // pred_region
      %s28 = ssub.s32 128, 128
      %29 = vsyncadd [#allocation4], %s28
      %s31 = sshll.u32 [#allocation5], 4
      %s32 = int_to_ptr.vmem [resolvable:$true] %s31
      %34 = dma.vmem_to_hbm [thread:$0]  %s32, 128, %s1, [#allocation4]
    $region13: #{tpu_custom_call.1} parent=1 // pred_fallthru
      _
    // Predicated region
    $region14: #{tpu_custom_call.1} parent=1 // pred_check
      _
    $region15: #{tpu_custom_call.1} parent=1 // pred_check_branch
      %36 = sbr.rel (0) target = $region17
    $region16: #{tpu_custom_call.1} parent=1 // pred_region
      %37 = dma.done [#allocation4], 128
    $region17: #{tpu_custom_call.1} parent=1 // pred_fallthru
      _
    %38 = vsyncpa [#allocation3], 1
    %39 = vsyncpa [#allocation4], 1

</llo_original>
